<compile_context>
chip_gen: v6e
topology: v6e:2x2x1
jax: 0.10.0
libtpu: 0.0.40
codegen_flags: <defaults>
</compile_context>

<pallas_src>
import jax
import jax.numpy as jnp
from jax.experimental import pallas as pl
from jax.experimental.pallas import tpu as pltpu

IMG_FEAT = 400                    # flattened LeNet5 conv feature (16*5*5)
SND_FEAT = 80                     # sound_mean feature size
CAT_FEAT = IMG_FEAT + SND_FEAT    # 480 == fc1.in_features
HID = 64                          # fc1.out_features
HID_PAD = 128                     # lane-dense hidden/f1 tile (sliced back to HID in wrapper)
OUT = 10                          # fc2.out_features
OUT_PAD = 128                     # lane-dense logits tile (sliced back to OUT in wrapper)
MAX_BATCH_TILE = 1024             # multiple of 8; ~14 MiB double-buffered working set
VMEM_LIMIT_BYTES = 32 * 1024 * 1024  # legal on v5e/v6e/v7x; covers 1024-row tiles


def _softplus(x):
    # matches torch.nn.Softplus(beta=1, threshold=20)
    return jnp.where(x > 20.0, x, jnp.log1p(jnp.exp(jnp.minimum(x, 20.0))))


def soundlenet5_head_kernel(img_ref, snd_ref, e1_ref, e2_ref,
                            w1_ref, b1_ref, w2_ref, b2_ref,
                            out_ref, f_ref, f1_ref):
    tb = img_ref.shape[0]

    # Inputs may arrive in bf16 (upstream extractor/encoder outputs); upcast in
    # VMEM so all arithmetic is f32 on every chip generation.
    img = img_ref[...].astype(jnp.float32)
    snd = snd_ref[...].astype(jnp.float32)
    e1 = e1_ref[...].astype(jnp.float32)
    e2 = e2_ref[...].astype(jnp.float32)

    # x = softplus(encoder({'fc1': img})['fc1']) + cat([img_feature, sound_feature])
    snd_b = jnp.broadcast_to(snd, (tb, SND_FEAT))
    cat = jnp.concatenate([img, snd_b], axis=-1)          # (tb, 480), built in VMEM
    x = cat + _softplus(e1)
    f_ref[...] = x                                        # returned as `f`

    # x = relu(fc1(x))   (w1/b1 zero-padded to 128 output lanes -> cols 64..127 are 0)
    h = jnp.dot(x, w1_ref[...], preferred_element_type=jnp.float32) + b1_ref[...]
    h = jnp.maximum(h, 0.0)                               # (tb, 128)

    # x = softplus(encoder({'fc2': x})['fc2']) + x  (only the first HID lanes are real)
    sp2 = _softplus(e2)                                   # (tb, 64)
    sp2_pad = jnp.concatenate(
        [sp2, jnp.zeros((tb, HID_PAD - HID), jnp.float32)], axis=-1)
    h = h + sp2_pad
    f1_ref[...] = h                                       # lane-dense (tb,128); wrapper slices [:, :HID]

    # dropout(p=0.6): eval-mode identity.
    # TODO(synk): training-mode dropout (pltpu.prng_random_bits mask / (1-p) scale) not applied.

    # x = fc2(x)   (w2 rows HID..127 and cols OUT..127 are zero -> exact, lane-dense store)
    out_ref[...] = jnp.dot(h, w2_ref[...], preferred_element_type=jnp.float32) + b2_ref[...]


def _choose_batch_tile(B, cap=MAX_BATCH_TILE):
    """Batch tile: multiple of 8, capped for VMEM, >=4 grid steps when B allows.

    >=2 grid steps are required for dimension_semantics=("parallel",) to shard
    across v7x's two TensorCores; >=4 keeps each core's double-buffer pipeline full.
    """
    if B <= 8:
        return B                     # full-dim block (always a legal block shape)
    target = -(-B // 4)              # cdiv(B, 4)
    target = ((target + 7) // 8) * 8 # round up to a multiple of 8
    return max(8, min(cap, target))


def soundlenet5_forward_mode_one(img_feature, sound_mean, enc_fc1, enc_fc2, params):
    """Replicates SoundLenet5.forward(..., mode='one', noise_layer=['conv1','conv2','fc1','fc2'])
    with eval-mode dropout.

    img_feature : (B, IMG_FEAT)  output of the (external) img_extractor, already flattened
    sound_mean  : (SND_FEAT,)    expanded to (B, SND_FEAT) inside the kernel
    enc_fc1     : (B, CAT_FEAT)  encoder({'fc1': img_feature})['fc1']  (external encoder output)
    enc_fc2     : (B, HID)       encoder({'fc2': x})['fc2']            (external encoder output)
    returns (logits, f, f1, sound_feature)

    Batch inputs keep their dtype (pass bf16 straight through for ~29% less HBM
    traffic); the kernel upcasts to f32 internally. Outputs are f32.
    """
    w1, b1, w2, b2 = params
    B = img_feature.shape[0]

    img2d = img_feature.reshape(B, IMG_FEAT)          # dtype preserved
    snd_row = sound_mean.reshape(1, SND_FEAT)         # dtype preserved
    e1 = enc_fc1
    e2 = enc_fc2

    # Tiny parameter prep: pad fc1 to 128 output lanes and fc2 to 128x128 with
    # zeros so all intermediate / output stores are lane-dense and the padded
    # lanes are exactly 0 (sliced off below).
    w1p = jnp.zeros((CAT_FEAT, HID_PAD), jnp.float32).at[:, :HID].set(w1.astype(jnp.float32))
    b1p = jnp.zeros((1, HID_PAD), jnp.float32).at[:, :HID].set(b1.reshape(1, HID).astype(jnp.float32))
    w2p = jnp.zeros((HID_PAD, OUT_PAD), jnp.float32).at[:HID, :OUT].set(w2.astype(jnp.float32))
    b2p = jnp.zeros((1, OUT_PAD), jnp.float32).at[:, :OUT].set(b2.reshape(1, OUT).astype(jnp.float32))

    tb = _choose_batch_tile(B)
    grid = (pl.cdiv(B, tb),)

    def batched(last):
        return pl.BlockSpec((tb, last), lambda i: (i, 0))

    def resident(shape):
        return pl.BlockSpec(shape, lambda i: (0, 0))   # weights stay VMEM-resident across steps

    out_shapes = (
        jax.ShapeDtypeStruct((B, OUT_PAD), jnp.float32),   # padded logits
        jax.ShapeDtypeStruct((B, CAT_FEAT), jnp.float32),  # f
        jax.ShapeDtypeStruct((B, HID_PAD), jnp.float32),   # padded f1
    )

    in_bytes_per_elem = jnp.dtype(img2d.dtype).itemsize
    bytes_per_row = (IMG_FEAT + CAT_FEAT + HID) * in_bytes_per_elem \
        + (OUT_PAD + CAT_FEAT + HID_PAD) * 4
    weight_bytes = 4 * (CAT_FEAT * HID_PAD + HID_PAD + HID_PAD * OUT_PAD + OUT_PAD + SND_FEAT)
    cost = pl.CostEstimate(
        flops=2 * B * (CAT_FEAT * HID_PAD + HID_PAD * OUT_PAD),
        transcendentals=2 * B * (CAT_FEAT + HID),          # exp + log1p per softplus element
        bytes_accessed=B * bytes_per_row + weight_bytes,
    )

    logits_pad, f, f1_pad = pl.pallas_call(
        soundlenet5_head_kernel,
        out_shape=out_shapes,
        grid=grid,
        in_specs=[
            batched(IMG_FEAT),            # img_feature tile
            resident((1, SND_FEAT)),      # sound_mean row
            batched(CAT_FEAT),            # enc_fc1 tile
            batched(HID),                 # enc_fc2 tile
            resident((CAT_FEAT, HID_PAD)),  # w1 (lane-padded)
            resident((1, HID_PAD)),         # b1 (lane-padded)
            resident((HID_PAD, OUT_PAD)),   # w2 (row/lane-padded)
            resident((1, OUT_PAD)),         # b2 (lane-padded)
        ],
        out_specs=[batched(OUT_PAD), batched(CAT_FEAT), batched(HID_PAD)],
        compiler_params=pltpu.CompilerParams(
            dimension_semantics=("parallel",),
            vmem_limit_bytes=VMEM_LIMIT_BYTES),
        cost_estimate=cost,
    )(img2d, snd_row, e1, e2, w1p, b1p, w2p, b2p)

    logits = logits_pad[:, :OUT]
    f1 = f1_pad[:, :HID]
    sound_feature = jnp.broadcast_to(snd_row, (B, SND_FEAT))
    return logits, f, f1, sound_feature


def _reference(img_feature, sound_mean, enc_fc1, enc_fc2, params):
    """Pure-JAX reference mirroring the torch forward (mode='one', eval-mode dropout)."""
    w1, b1, w2, b2 = params
    B = img_feature.shape[0]
    sound_feature = jnp.broadcast_to(sound_mean[None, :], (B, SND_FEAT))
    x = jnp.concatenate([img_feature.reshape(B, -1), sound_feature], axis=1).astype(jnp.float32)
    x = _softplus(enc_fc1.astype(jnp.float32)) + x
    f = x
    x = jnp.maximum(x @ w1 + b1, 0.0)
    x = _softplus(enc_fc2.astype(jnp.float32)) + x
    f1 = x
    x = x @ w2 + b2
    return x, f, f1, sound_feature


def init_params(key):
    """Deterministic nn.Linear-style init: U(-1/sqrt(fan_in), 1/sqrt(fan_in))."""
    k1, k2, k3, k4 = jax.random.split(key, 4)
    bound1 = 1.0 / (CAT_FEAT ** 0.5)
    bound2 = 1.0 / (HID ** 0.5)
    w1 = jax.random.uniform(k1, (CAT_FEAT, HID), jnp.float32, -bound1, bound1)
    b1 = jax.random.uniform(k2, (HID,), jnp.float32, -bound1, bound1)
    w2 = jax.random.uniform(k3, (HID, OUT), jnp.float32, -bound2, bound2)
    b2 = jax.random.uniform(k4, (OUT,), jnp.float32, -bound2, bound2)
    return w1, b1, w2, b2


if __name__ == "__main__":
    B = 2
    key = jax.random.PRNGKey(0)
    kp, ki, ks, ke1, ke2 = jax.random.split(key, 5)

    params = init_params(kp)
    img_feature = jax.random.normal(ki, (B, IMG_FEAT), jnp.float32)
    sound_mean = jax.random.normal(ks, (SND_FEAT,), jnp.float32)
    enc_fc1 = jax.random.normal(ke1, (B, CAT_FEAT), jnp.float32)
    enc_fc2 = jax.random.normal(ke2, (B, HID), jnp.float32)

    fwd = jax.jit(soundlenet5_forward_mode_one)
    logits, f, f1, snd = fwd(img_feature, sound_mean, enc_fc1, enc_fc2, params)
    jax.block_until_ready((logits, f, f1, snd))

    r_logits, r_f, r_f1, r_snd = _reference(
        img_feature, sound_mean, enc_fc1, enc_fc2, params)
    assert logits.shape == (B, OUT) and f.shape == (B, CAT_FEAT) and f1.shape == (B, HID)
    assert snd.shape == (B, SND_FEAT)
    assert jnp.allclose(logits, r_logits, atol=1e-4, rtol=1e-4)
    assert jnp.allclose(f, r_f, atol=1e-4, rtol=1e-4)
    assert jnp.allclose(f1, r_f1, atol=1e-4, rtol=1e-4)
    assert jnp.allclose(snd, r_snd)

    print("KERNEL_OK")
</pallas_src>

<mosaic_0001>
module attributes {stable_mosaic.version = 11 : i64} {
  func.func @soundlenet5_head_kernel(%arg0: i32, %arg1: memref<2x400xf32, #tpu.memory_space<vmem>>, %arg2: memref<1x80xf32, #tpu.memory_space<vmem>>, %arg3: memref<2x480xf32, #tpu.memory_space<vmem>>, %arg4: memref<2x64xf32, #tpu.memory_space<vmem>>, %arg5: memref<480x128xf32, #tpu.memory_space<vmem>>, %arg6: memref<1x128xf32, #tpu.memory_space<vmem>>, %arg7: memref<128x128xf32, #tpu.memory_space<vmem>>, %arg8: memref<1x128xf32, #tpu.memory_space<vmem>>, %arg9: memref<2x128xf32, #tpu.memory_space<vmem>>, %arg10: memref<2x480xf32, #tpu.memory_space<vmem>>, %arg11: memref<2x128xf32, #tpu.memory_space<vmem>>) attributes {dimension_semantics = [#tpu.dimension_semantics<parallel>], iteration_bounds = array<i64: 1>, scalar_prefetch = 0 : i64, scratch_operands = 0 : i64, tpu.core_type = #tpu.core_type<tc>, window_params = [{transform_indices = @transform_0, window_bounds = array<i64: 2, 400>}, {pipeline_mode = #tpu.pipeline_mode<synchronous>, transform_indices = @transform_1, window_bounds = array<i64: 1, 80>}, {transform_indices = @transform_2, window_bounds = array<i64: 2, 480>}, {transform_indices = @transform_3, window_bounds = array<i64: 2, 64>}, {pipeline_mode = #tpu.pipeline_mode<synchronous>, transform_indices = @transform_4, window_bounds = array<i64: 480, 128>}, {pipeline_mode = #tpu.pipeline_mode<synchronous>, transform_indices = @transform_5, window_bounds = array<i64: 1, 128>}, {pipeline_mode = #tpu.pipeline_mode<synchronous>, transform_indices = @transform_6, window_bounds = array<i64: 128, 128>}, {pipeline_mode = #tpu.pipeline_mode<synchronous>, transform_indices = @transform_7, window_bounds = array<i64: 1, 128>}, {transform_indices = @transform_8, window_bounds = array<i64: 2, 128>}, {transform_indices = @transform_9, window_bounds = array<i64: 2, 480>}, {transform_indices = @transform_10, window_bounds = array<i64: 2, 128>}]} {
    %c0 = arith.constant 0 : index
    %c0_0 = arith.constant 0 : index
    %0 = vector.load %arg1[%c0, %c0_0] : memref<2x400xf32, #tpu.memory_space<vmem>>, vector<2x400xf32>
    %c0_1 = arith.constant 0 : index
    %c0_2 = arith.constant 0 : index
    %1 = vector.load %arg2[%c0_1, %c0_2] : memref<1x80xf32, #tpu.memory_space<vmem>>, vector<1x80xf32>
    %c0_3 = arith.constant 0 : index
    %c0_4 = arith.constant 0 : index
    %2 = vector.load %arg3[%c0_3, %c0_4] : memref<2x480xf32, #tpu.memory_space<vmem>>, vector<2x480xf32>
    %c0_5 = arith.constant 0 : index
    %c0_6 = arith.constant 0 : index
    %3 = vector.load %arg4[%c0_5, %c0_6] : memref<2x64xf32, #tpu.memory_space<vmem>>, vector<2x64xf32>
    %4 = vector.shape_cast %1 : vector<1x80xf32> to vector<1x80xf32>
    %5 = vector.broadcast %4 : vector<1x80xf32> to vector<2x80xf32>
    %6 = tpu.concatenate %0, %5 in 1 : vector<2x400xf32>, vector<2x80xf32> -> vector<2x480xf32>
    %cst = arith.constant 2.000000e+01 : f32
    %7 = vector.broadcast %cst : f32 to vector<2x480xf32>
    %8 = arith.cmpf ogt, %2, %7 : vector<2x480xf32>
    %cst_7 = arith.constant 2.000000e+01 : f32
    %9 = vector.broadcast %cst_7 : f32 to vector<2x480xf32>
    %10 = arith.minimumf %2, %9 : vector<2x480xf32>
    %11 = math.exp %10 : vector<2x480xf32>
    %12 = math.log1p %11 : vector<2x480xf32>
    %13 = arith.select %8, %2, %12 : vector<2x480xi1>, vector<2x480xf32>
    %14 = arith.addf %6, %13 : vector<2x480xf32>
    %c0_8 = arith.constant 0 : index
    %c0_9 = arith.constant 0 : index
    %15 = vector.load %arg10[%c0_8, %c0_9] : memref<2x480xf32, #tpu.memory_space<vmem>>, vector<2x480xf32>
    tpu.vector_store %arg10[%c0_8, %c0_9], %14 {strides = array<i32>} : memref<2x480xf32, #tpu.memory_space<vmem>>, vector<2x480xf32>,
    %c0_10 = arith.constant 0 : index
    %c0_11 = arith.constant 0 : index
    %16 = vector.load %arg5[%c0_10, %c0_11] : memref<480x128xf32, #tpu.memory_space<vmem>>, vector<480x128xf32>
    %cst_12 = arith.constant dense<0.000000e+00> : vector<2x128xf32>
    %17 = tpu.matmul %14, %16, %cst_12 {dimension_numbers = #tpu.dot_dimension_numbers<[1], [0], [0], [1], [0, 0, 1, 1], [], []>} : vector<2x480xf32>, vector<480x128xf32>, vector<2x128xf32> -> vector<2x128xf32>
    %c0_13 = arith.constant 0 : index
    %c0_14 = arith.constant 0 : index
    %18 = vector.load %arg6[%c0_13, %c0_14] : memref<1x128xf32, #tpu.memory_space<vmem>>, vector<1x128xf32>
    %19 = vector.broadcast %18 : vector<1x128xf32> to vector<2x128xf32>
    %20 = arith.addf %17, %19 : vector<2x128xf32>
    %cst_15 = arith.constant 0.000000e+00 : f32
    %21 = vector.broadcast %cst_15 : f32 to vector<2x128xf32>
    %22 = arith.maximumf %20, %21 : vector<2x128xf32>
    %cst_16 = arith.constant 2.000000e+01 : f32
    %23 = vector.broadcast %cst_16 : f32 to vector<2x64xf32>
    %24 = arith.cmpf ogt, %3, %23 : vector<2x64xf32>
    %cst_17 = arith.constant 2.000000e+01 : f32
    %25 = vector.broadcast %cst_17 : f32 to vector<2x64xf32>
    %26 = arith.minimumf %3, %25 : vector<2x64xf32>
    %27 = math.exp %26 : vector<2x64xf32>
    %28 = math.log1p %27 : vector<2x64xf32>
    %29 = arith.select %24, %3, %28 : vector<2x64xi1>, vector<2x64xf32>
    %cst_18 = arith.constant 0.000000e+00 : f32
    %30 = vector.broadcast %cst_18 : f32 to vector<2x64xf32>
    %31 = tpu.concatenate %29, %30 in 1 : vector<2x64xf32>, vector<2x64xf32> -> vector<2x128xf32>
    %32 = arith.addf %22, %31 : vector<2x128xf32>
    %c0_19 = arith.constant 0 : index
    %c0_20 = arith.constant 0 : index
    %33 = vector.load %arg11[%c0_19, %c0_20] : memref<2x128xf32, #tpu.memory_space<vmem>>, vector<2x128xf32>
    tpu.vector_store %arg11[%c0_19, %c0_20], %32 {strides = array<i32>} : memref<2x128xf32, #tpu.memory_space<vmem>>, vector<2x128xf32>,
    %c0_21 = arith.constant 0 : index
    %c0_22 = arith.constant 0 : index
    %34 = vector.load %arg7[%c0_21, %c0_22] : memref<128x128xf32, #tpu.memory_space<vmem>>, vector<128x128xf32>
    %cst_23 = arith.constant dense<0.000000e+00> : vector<2x128xf32>
    %35 = tpu.matmul %32, %34, %cst_23 {dimension_numbers = #tpu.dot_dimension_numbers<[1], [0], [0], [1], [0, 0, 1, 1], [], []>} : vector<2x128xf32>, vector<128x128xf32>, vector<2x128xf32> -> vector<2x128xf32>
    %c0_24 = arith.constant 0 : index
    %c0_25 = arith.constant 0 : index
    %36 = vector.load %arg8[%c0_24, %c0_25] : memref<1x128xf32, #tpu.memory_space<vmem>>, vector<1x128xf32>
    %37 = vector.broadcast %36 : vector<1x128xf32> to vector<2x128xf32>
    %38 = arith.addf %35, %37 : vector<2x128xf32>
    %c0_26 = arith.constant 0 : index
    %c0_27 = arith.constant 0 : index
    %39 = vector.load %arg9[%c0_26, %c0_27] : memref<2x128xf32, #tpu.memory_space<vmem>>, vector<2x128xf32>
    tpu.vector_store %arg9[%c0_26, %c0_27], %38 {strides = array<i32>} : memref<2x128xf32, #tpu.memory_space<vmem>>, vector<2x128xf32>,
    return
  }
  func.func @transform_0(%arg0: i32) -> (i32, i32) {
    %c0_i32 = arith.constant 0 : i32
    %c0_i32_0 = arith.constant 0 : i32
    return %arg0, %c0_i32 : i32, i32
  }
  func.func @transform_1(%arg0: i32) -> (i32, i32) {
    %c0_i32 = arith.constant 0 : i32
    %c0_i32_0 = arith.constant 0 : i32
    %c0_i32_1 = arith.constant 0 : i32
    return %c0_i32, %c0_i32_0 : i32, i32
  }
  func.func @transform_2(%arg0: i32) -> (i32, i32) {
    %c0_i32 = arith.constant 0 : i32
    %c0_i32_0 = arith.constant 0 : i32
    return %arg0, %c0_i32 : i32, i32
  }
  func.func @transform_3(%arg0: i32) -> (i32, i32) {
    %c0_i32 = arith.constant 0 : i32
    %c0_i32_0 = arith.constant 0 : i32
    return %arg0, %c0_i32 : i32, i32
  }
  func.func @transform_4(%arg0: i32) -> (i32, i32) {
    %c0_i32 = arith.constant 0 : i32
    %c0_i32_0 = arith.constant 0 : i32
    %c0_i32_1 = arith.constant 0 : i32
    return %c0_i32, %c0_i32_0 : i32, i32
  }
  func.func @transform_5(%arg0: i32) -> (i32, i32) {
    %c0_i32 = arith.constant 0 : i32
    %c0_i32_0 = arith.constant 0 : i32
    %c0_i32_1 = arith.constant 0 : i32
    return %c0_i32, %c0_i32_0 : i32, i32
  }
  func.func @transform_6(%arg0: i32) -> (i32, i32) {
    %c0_i32 = arith.constant 0 : i32
    %c0_i32_0 = arith.constant 0 : i32
    %c0_i32_1 = arith.constant 0 : i32
    return %c0_i32, %c0_i32_0 : i32, i32
  }
  func.func @transform_7(%arg0: i32) -> (i32, i32) {
    %c0_i32 = arith.constant 0 : i32
    %c0_i32_0 = arith.constant 0 : i32
    %c0_i32_1 = arith.constant 0 : i32
    return %c0_i32, %c0_i32_0 : i32, i32
  }
  func.func @transform_8(%arg0: i32) -> (i32, i32) {
    %c0_i32 = arith.constant 0 : i32
    %c0_i32_0 = arith.constant 0 : i32
    return %arg0, %c0_i32 : i32, i32
  }
  func.func @transform_9(%arg0: i32) -> (i32, i32) {
    %c0_i32 = arith.constant 0 : i32
    %c0_i32_0 = arith.constant 0 : i32
    return %arg0, %c0_i32 : i32, i32
  }
  func.func @transform_10(%arg0: i32) -> (i32, i32) {
    %c0_i32 = arith.constant 0 : i32
    %c0_i32_0 = arith.constant 0 : i32
    return %arg0, %c0_i32 : i32, i32
  }
}

</mosaic_0001>

<llo_original>
// kernel: soundlenet5_forward_mode_one.1
$region0: #{soundlenet5_forward_mode_one.1}
  #allocation0 [shape = 'u32[]', space=smem, size = 0x4, offset = 0x4, fixed_abs, tag = 'smem constant byte address 0x4 - core index']
  #allocation1 [shape = 'u32[144,128]{1,0:T(1,128)}', space=vmem, size = 0x12000, scoped, tag = 'internal scratch']
  %s0 = inlined_call_operand.vmem [shape: f32[2,400], index: 0, kind: input, shape index: {}]
  %s1 = inlined_call_operand.vmem [shape: f32[1,80], index: 1, kind: input, shape index: {}]
  %s2 = inlined_call_operand.vmem [shape: f32[2,480], index: 2, kind: input, shape index: {}]
  %s3 = inlined_call_operand.vmem [shape: f32[2,64], index: 3, kind: input, shape index: {}]
  %s4 = inlined_call_operand.vmem [shape: f32[480,128], index: 4, kind: input, shape index: {}]
  %s5 = inlined_call_operand.vmem [shape: f32[1,128], index: 5, kind: input, shape index: {}]
  %s6 = inlined_call_operand.vmem [shape: f32[128,128], index: 6, kind: input, shape index: {}]
  %s7 = inlined_call_operand.vmem [shape: f32[1,128], index: 7, kind: input, shape index: {}]
  %s8 = inlined_call_operand.hbm [shape: f32[2,128], index: 8, kind: output, shape index: {0}]
  %s9 = inlined_call_operand.hbm [shape: f32[2,480], index: 9, kind: output, shape index: {1}]
  %s10 = inlined_call_operand.hbm [shape: f32[2,128], index: 10, kind: output, shape index: {2}]
  %11 = xla_tuple %s8, %s9, %s10
  %s12 = sld [smem:[#allocation0]]
  $region58: #{soundlenet5_forward_mode_one.1} parent=0
    _
  %s14 = ssub.s32 1, %s12
  %s15 = scalar_select 0, %s14, %s12
  $region1: #{soundlenet5_forward_mode_one.1} parent=0
    #allocation2 [shape = 'u8[1024]{0}', space=vmem, size = 0x400, scoped, tag = 'output window, operand 0, single buffered']
    #allocation3 [shape = 's32[1]{0}', space=sflag, size = 0x4, scoped, tag = 'scoped memory for soundlenet5_forward_mode_one.1']
    #allocation4 [shape = 'u8[4096]{0}', space=vmem, size = 0x1000, scoped, tag = 'output window, operand 1, single buffered']
    #allocation5 [shape = 's32[1]{0}', space=sflag, size = 0x4, scoped, tag = 'scoped memory for soundlenet5_forward_mode_one.1']
    #allocation6 [shape = 'u8[1024]{0}', space=vmem, size = 0x400, scoped, tag = 'output window, operand 2, single buffered']
    %16 = vsyncpa [#allocation3], 0
    %17 = vsyncpa [#allocation5], 0
    // Predicated region
    $region2: #{soundlenet5_forward_mode_one.1} parent=1 // pred_check
      _
    $region3: #{soundlenet5_forward_mode_one.1} parent=1 // pred_check_branch
      %19 = sbr.rel (0) target = $region5
    $region4: #{soundlenet5_forward_mode_one.1} parent=1 // pred_region
      _
    $region5: #{soundlenet5_forward_mode_one.1} parent=1 // pred_fallthru
      _
    // Predicated region
    $region6: #{soundlenet5_forward_mode_one.1} parent=1 // pred_check
      _
    $region7: #{soundlenet5_forward_mode_one.1} parent=1 // pred_check_branch
      %21 = sbr.rel (0) target = $region9
    $region8: #{soundlenet5_forward_mode_one.1} parent=1 // pred_region
      _
    $region9: #{soundlenet5_forward_mode_one.1} parent=1 // pred_fallthru
      _
    // Predicated region
    $region10: #{soundlenet5_forward_mode_one.1} parent=1 // pred_check
      _
    $region11: #{soundlenet5_forward_mode_one.1} parent=1 // pred_check_branch
      %23 = sbr.rel (0) target = $region13
    $region12: #{soundlenet5_forward_mode_one.1} parent=1 // pred_region
      _
    $region13: #{soundlenet5_forward_mode_one.1} parent=1 // pred_fallthru
      _
    // Predicated region
    $region14: #{soundlenet5_forward_mode_one.1} parent=1 // pred_check
      _
    $region15: #{soundlenet5_forward_mode_one.1} parent=1 // pred_check_branch
      %25 = sbr.rel (0) target = $region17
    $region16: #{soundlenet5_forward_mode_one.1} parent=1 // pred_region
      _
    $region17: #{soundlenet5_forward_mode_one.1} parent=1 // pred_fallthru
      _
    // Predicated region
    $region18: #{soundlenet5_forward_mode_one.1} parent=1 // pred_check
      _
    $region19: #{soundlenet5_forward_mode_one.1} parent=1 // pred_check_branch
      %27 = sbr.rel (0) target = $region21
    $region20: #{soundlenet5_forward_mode_one.1} parent=1 // pred_region
      _
    $region21: #{soundlenet5_forward_mode_one.1} parent=1 // pred_fallthru
      _
    // Predicated region
    $region22: #{soundlenet5_forward_mode_one.1} parent=1 // pred_check
      _
    $region23: #{soundlenet5_forward_mode_one.1} parent=1 // pred_check_branch
      %29 = sbr.rel (0) target = $region25
    $region24: #{soundlenet5_forward_mode_one.1} parent=1 // pred_region
      _
    $region25: #{soundlenet5_forward_mode_one.1} parent=1 // pred_fallthru
      _
    // Predicated region
    $region26: #{soundlenet5_forward_mode_one.1} parent=1 // pred_check
      _
    $region27: #{soundlenet5_forward_mode_one.1} parent=1 // pred_check_branch
      %31 = sbr.rel (0) target = $region29
    $region28: #{soundlenet5_forward_mode_one.1} parent=1 // pred_region
      _
    $region29: #{soundlenet5_forward_mode_one.1} parent=1 // pred_fallthru
      _
    // Predicated region
    $region30: #{soundlenet5_forward_mode_one.1} parent=1 // pred_check
      _
    $region31: #{soundlenet5_forward_mode_one.1} parent=1 // pred_check_branch
      %33 = sbr.rel (0) target = $region33
    $region32: #{soundlenet5_forward_mode_one.1} parent=1 // pred_region
      _
    $region33: #{soundlenet5_forward_mode_one.1} parent=1 // pred_fallthru
      _
    %v34 = vld [vmem:[%s0] sm:$0xff]
    %v35 = vld [vmem:[%s1] sm:$0x1]
    %v36 = vld [vmem:[%s2] sm:$0xff]
    %v37 = vld [vmem:[%s3] sm:$0x3]
    %v39 = vlaneseq
    %v40 = vshrl.u32 %v39, 7
    %v41 = vsub.s32 0, %v40
    %v42 = vrot.slane %v35, %v41
    %v44 = vcombine.high %v34, %v34
    %v46 = vunpack.c.l.s4 1983009808
    %v47 = vunpack.c.0.s8 %v46
    %v48 = vlaneseq
    %v49 = vshrl.u32 %v48, 7
    %v50 = vsub.s32 %v47, %v49
    %v51 = vrot.slane %v34, %v50
    %v53 = vunpack.c.l.s4 1983009808
    %v54 = vunpack.c.0.s8 %v53
    %v55 = vlaneseq
    %v56 = vshrl.u32 %v55, 7
    %v57 = vsub.s32 %v54, %v56
    %v58 = vrot.slane %v44, %v57
    %v59 = vcombine.high %v51, %v51
    %v60 = vcombine.high %v58, %v58
    %65 = vrot.lane.b32.xlu0 %v42, 16
    %v66 = vpop.permute.xlu0 %65
    %vm68 = vcmask 130048
    %v69 = vsel %vm68, %v60, %v66
    %vm70 = vcmp.gt.f32.partialorder %v36, 20.0
    %v71 = vmin.f32 %v36, 20.0
    %v72 = vmul.f32 %v71, 1.442695
    %v73 = vpow.pop %v72
    %v74 = vadd.f32 %v73, 1.0
    %v75 = vlog2.pop %v74
    %v76 = vmul.f32 %v75, 0.6931472
    %v77 = vmul.f32 -0.5, %v73
    %v78 = vadd.f32 %v77, 1.0
    %v79 = vmul.f32 %v78, %v73
    %v80 = vand.u32 2147483647, %v73
    %vm81 = vcmp.lt.f32.partialorder %v80, 0.0004427343
    %v82 = vsel %vm81, %v79, %v76
    %v83 = vsel %vm70, %v36, %v82
    %v85 = vcombine.high %v83, %v83
    %v87 = vunpack.c.l.s4 1983009808
    %v88 = vunpack.c.0.s8 %v87
    %v89 = vlaneseq
    %v90 = vshrl.u32 %v89, 7
    %v91 = vsub.s32 %v88, %v90
    %v92 = vrot.slane %v83, %v91
    %v94 = vunpack.c.l.s4 1983009808
    %v95 = vunpack.c.0.s8 %v94
    %v96 = vlaneseq
    %v97 = vshrl.u32 %v96, 7
    %v98 = vsub.s32 %v95, %v97
    %v99 = vrot.slane %v85, %v98
    %v100 = vcombine.high %v92, %v92
    %v101 = vcombine.high %v99, %v99
    %v106 = vadd.f32 %v51, %v92
    %v107 = vadd.f32 %v59, %v100
    %v108 = vadd.f32 %v58, %v99
    %v109 = vadd.f32 %v69, %v101
    %v114 = vcombine.low %v106, %v107
    %v115 = vcombine.low %v108, %v109
    %v117 = vunpack.c.l.s4 1983009808
    %v118 = vunpack.c.0.s8 %v117
    %v119 = vlaneseq
    %v120 = vshrl.u32 %v119, 7
    %v121 = vsub.s32 %v118, %v120
    %v122 = vrot.slane %v114, %v121
    %v124 = vunpack.c.l.s4 1983009808
    %v125 = vunpack.c.0.s8 %v124
    %v126 = vlaneseq
    %v127 = vshrl.u32 %v126, 7
    %v128 = vsub.s32 %v125, %v127
    %v129 = vrot.slane %v115, %v128
    %v130 = vcombine.low %v122, %v129
    %vm132 = vcmask 1041408
    %vm133 = vcmask 1043458
    %vm134 = vmor %vm133, %vm132
    %vm135 = vcmask 1045508
    %vm136 = vmor %vm135, %vm134
    %vm137 = vcmask 785414
    %vm138 = vmor %vm137, %vm136
    %139 = vst.msk [vmem:[#allocation4] sm:$0xff] %vm138, %v130
    %v140 = vld [vmem:[%s4] sm:$0xff]
    %v141 = vld [vmem:[%s4 + $0x8] sm:$0xff]
    %v142 = vld [vmem:[%s4 + $0x10] sm:$0xff]
    %v143 = vld [vmem:[%s4 + $0x18] sm:$0xff]
    %v144 = vld [vmem:[%s4 + $0x20] sm:$0xff]
    %v145 = vld [vmem:[%s4 + $0x28] sm:$0xff]
    %v146 = vld [vmem:[%s4 + $0x30] sm:$0xff]
    %v147 = vld [vmem:[%s4 + $0x38] sm:$0xff]
    %v148 = vld [vmem:[%s4 + $0x40] sm:$0xff]
    %v149 = vld [vmem:[%s4 + $0x48] sm:$0xff]
    %v150 = vld [vmem:[%s4 + $0x50] sm:$0xff]
    %v151 = vld [vmem:[%s4 + $0x58] sm:$0xff]
    %v152 = vld [vmem:[%s4 + $0x60] sm:$0xff]
    %v153 = vld [vmem:[%s4 + $0x68] sm:$0xff]
    %v154 = vld [vmem:[%s4 + $0x70] sm:$0xff]
    %v155 = vld [vmem:[%s4 + $0x78] sm:$0xff]
    %v156 = vld [vmem:[%s4 + $0x80] sm:$0xff]
    %v157 = vld [vmem:[%s4 + $0x88] sm:$0xff]
    %v158 = vld [vmem:[%s4 + $0x90] sm:$0xff]
    %v159 = vld [vmem:[%s4 + $0x98] sm:$0xff]
    %v160 = vld [vmem:[%s4 + $0xa0] sm:$0xff]
    %v161 = vld [vmem:[%s4 + $0xa8] sm:$0xff]
    %v162 = vld [vmem:[%s4 + $0xb0] sm:$0xff]
    %v163 = vld [vmem:[%s4 + $0xb8] sm:$0xff]
    %v164 = vld [vmem:[%s4 + $0xc0] sm:$0xff]
    %v165 = vld [vmem:[%s4 + $0xc8] sm:$0xff]
    %v166 = vld [vmem:[%s4 + $0xd0] sm:$0xff]
    %v167 = vld [vmem:[%s4 + $0xd8] sm:$0xff]
    %v168 = vld [vmem:[%s4 + $0xe0] sm:$0xff]
    %v169 = vld [vmem:[%s4 + $0xe8] sm:$0xff]
    %v170 = vld [vmem:[%s4 + $0xf0] sm:$0xff]
    %v171 = vld [vmem:[%s4 + $0xf8] sm:$0xff]
    %v172 = vld [vmem:[%s4 + $0x100] sm:$0xff]
    %v173 = vld [vmem:[%s4 + $0x108] sm:$0xff]
    %v174 = vld [vmem:[%s4 + $0x110] sm:$0xff]
    %v175 = vld [vmem:[%s4 + $0x118] sm:$0xff]
    %v176 = vld [vmem:[%s4 + $0x120] sm:$0xff]
    %v177 = vld [vmem:[%s4 + $0x128] sm:$0xff]
    %v178 = vld [vmem:[%s4 + $0x130] sm:$0xff]
    %v179 = vld [vmem:[%s4 + $0x138] sm:$0xff]
    %v180 = vld [vmem:[%s4 + $0x140] sm:$0xff]
    %v181 = vld [vmem:[%s4 + $0x148] sm:$0xff]
    %v182 = vld [vmem:[%s4 + $0x150] sm:$0xff]
    %v183 = vld [vmem:[%s4 + $0x158] sm:$0xff]
    %v184 = vld [vmem:[%s4 + $0x160] sm:$0xff]
    %v185 = vld [vmem:[%s4 + $0x168] sm:$0xff]
    %v186 = vld [vmem:[%s4 + $0x170] sm:$0xff]
    %v187 = vld [vmem:[%s4 + $0x178] sm:$0xff]
    %v188 = vld [vmem:[%s4 + $0x180] sm:$0xff]
    %v189 = vld [vmem:[%s4 + $0x188] sm:$0xff]
    %v190 = vld [vmem:[%s4 + $0x190] sm:$0xff]
    %v191 = vld [vmem:[%s4 + $0x198] sm:$0xff]
    %v192 = vld [vmem:[%s4 + $0x1a0] sm:$0xff]
    %v193 = vld [vmem:[%s4 + $0x1a8] sm:$0xff]
    %v194 = vld [vmem:[%s4 + $0x1b0] sm:$0xff]
    %v195 = vld [vmem:[%s4 + $0x1b8] sm:$0xff]
    %v196 = vld [vmem:[%s4 + $0x1c0] sm:$0xff]
    %v197 = vld [vmem:[%s4 + $0x1c8] sm:$0xff]
    %v198 = vld [vmem:[%s4 + $0x1d0] sm:$0xff]
    %v199 = vld [vmem:[%s4 + $0x1d8] sm:$0xff]
    %v200 = vld [vmem:[%s5] sm:$0x1]
    %v202 = vlaneseq
    %v203 = vshrl.u32 %v202, 7
    %v204 = vsub.s32 0, %v203
    %v205 = vrot.slane %v200, %v204
    %vm207 = vcmask 785408
    %v208 = vsel %vm207, %v109, 0
    %210 = vmatprep.subr.mxu0 0.0
    %211 = vmatpush1.msra.mxu0 %v155
    %212 = vmatprep.subr.mxu0 0.0
    %213 = vmatpush1.msra.mxu0 %v154
    %214 = vmatprep.subr.mxu0 0.0
    %215 = vmatpush1.msra.mxu0 %v153
    %216 = vmatprep.subr.mxu0 0.0
    %217 = vmatpush1.msra.mxu0 %v152
    %218 = vmatprep.subr.mxu0 0.0
    %219 = vmatpush1.msra.mxu0 %v151
    %220 = vmatprep.subr.mxu0 0.0
    %221 = vmatpush1.msra.mxu0 %v150
    %222 = vmatprep.subr.mxu0 0.0
    %223 = vmatpush1.msra.mxu0 %v149
    %224 = vmatprep.subr.mxu0 0.0
    %225 = vmatpush1.msra.mxu0 %v148
    %226 = vmatprep.subr.mxu0 0.0
    %227 = vmatpush1.msra.mxu0 %v147
    %228 = vmatprep.subr.mxu0 0.0
    %229 = vmatpush1.msra.mxu0 %v146
    %230 = vmatprep.subr.mxu0 0.0
    %231 = vmatpush1.msra.mxu0 %v145
    %232 = vmatprep.subr.mxu0 0.0
    %233 = vmatpush1.msra.mxu0 %v144
    %234 = vmatprep.subr.mxu0 0.0
    %235 = vmatpush1.msra.mxu0 %v143
    %236 = vmatprep.subr.mxu0 0.0
    %237 = vmatpush1.msra.mxu0 %v142
    %238 = vmatprep.subr.mxu0 0.0
    %239 = vmatpush1.msra.mxu0 %v141
    %240 = vmatprep.subr.mxu0 0.0
    %241 = vmatpush1.msra.mxu0 %v140
    %242 = vmatprep.subr.mxu0 0.0
    %243 = vmatpush2.msra.mxu0 %v171
    %244 = vmatprep.subr.mxu0 0.0
    %245 = vmatpush2.msra.mxu0 %v170
    %246 = vmatprep.subr.mxu0 0.0
    %247 = vmatpush2.msra.mxu0 %v169
    %248 = vmatprep.subr.mxu0 0.0
    %249 = vmatpush2.msra.mxu0 %v168
    %250 = vmatprep.subr.mxu0 0.0
    %251 = vmatpush2.msra.mxu0 %v167
    %252 = vmatprep.subr.mxu0 0.0
    %253 = vmatpush2.msra.mxu0 %v166
    %254 = vmatprep.subr.mxu0 0.0
    %255 = vmatpush2.msra.mxu0 %v165
    %256 = vmatprep.subr.mxu0 0.0
    %257 = vmatpush2.msra.mxu0 %v164
    %258 = vmatprep.subr.mxu0 0.0
    %259 = vmatpush2.msra.mxu0 %v163
    %260 = vmatprep.subr.mxu0 0.0
    %261 = vmatpush2.msra.mxu0 %v162
    %262 = vmatprep.subr.mxu0 0.0
    %263 = vmatpush2.msra.mxu0 %v161
    %264 = vmatprep.subr.mxu0 0.0
    %265 = vmatpush2.msra.mxu0 %v160
    %266 = vmatprep.subr.mxu0 0.0
    %267 = vmatpush2.msra.mxu0 %v159
    %268 = vmatprep.subr.mxu0 0.0
    %269 = vmatpush2.msra.mxu0 %v158
    %270 = vmatprep.subr.mxu0 0.0
    %271 = vmatpush2.msra.mxu0 %v157
    %272 = vmatprep.subr.mxu0 0.0
    %273 = vmatpush2.msra.mxu0 %v156
    %274 = vmatprep.mubr.f32.mxu0 %v107
    %275 = vmatmul.mubr.f32.gmra.mxu0 %v106
    %v276 = vpop.f32.mrf.mxu0
    %v277 = vadd.f32 %v205, %v276
    %v278 = vpop.f32.mrf.mxu0
    %279 = vdwg.mxu0
    %280 = vmatprep.subr.mxu0 0.0
    %281 = vmatpush1.msra.mxu0 %v187
    %282 = vmatprep.subr.mxu0 0.0
    %283 = vmatpush1.msra.mxu0 %v186
    %284 = vmatprep.subr.mxu0 0.0
    %285 = vmatpush1.msra.mxu0 %v185
    %286 = vmatprep.subr.mxu0 0.0
    %287 = vmatpush1.msra.mxu0 %v184
    %288 = vmatprep.subr.mxu0 0.0
    %289 = vmatpush1.msra.mxu0 %v183
    %290 = vmatprep.subr.mxu0 0.0
    %291 = vmatpush1.msra.mxu0 %v182
    %292 = vmatprep.subr.mxu0 0.0
    %293 = vmatpush1.msra.mxu0 %v181
    %294 = vmatprep.subr.mxu0 0.0
    %295 = vmatpush1.msra.mxu0 %v180
    %296 = vmatprep.subr.mxu0 0.0
    %297 = vmatpush1.msra.mxu0 %v179
    %298 = vmatprep.subr.mxu0 0.0
    %299 = vmatpush1.msra.mxu0 %v178
    %300 = vmatprep.subr.mxu0 0.0
    %301 = vmatpush1.msra.mxu0 %v177
    %302 = vmatprep.subr.mxu0 0.0
    %303 = vmatpush1.msra.mxu0 %v176
    %304 = vmatprep.subr.mxu0 0.0
    %305 = vmatpush1.msra.mxu0 %v175
    %306 = vmatprep.subr.mxu0 0.0
    %307 = vmatpush1.msra.mxu0 %v174
    %308 = vmatprep.subr.mxu0 0.0
    %309 = vmatpush1.msra.mxu0 %v173
    %310 = vmatprep.subr.mxu0 0.0
    %311 = vmatpush1.msra.mxu0 %v172
    %312 = vmatprep.subr.mxu0 0.0
    %313 = vmatpush2.msra.mxu0 0.0
    %314 = vmatprep.subr.mxu0 0.0
    %315 = vmatpush2.msra.mxu0 0.0
    %316 = vmatprep.subr.mxu0 0.0
    %317 = vmatpush2.msra.mxu0 0.0
    %318 = vmatprep.subr.mxu0 0.0
    %319 = vmatpush2.msra.mxu0 0.0
    %320 = vmatprep.subr.mxu0 0.0
    %321 = vmatpush2.msra.mxu0 %v199
    %322 = vmatprep.subr.mxu0 0.0
    %323 = vmatpush2.msra.mxu0 %v198
    %324 = vmatprep.subr.mxu0 0.0
    %325 = vmatpush2.msra.mxu0 %v197
    %326 = vmatprep.subr.mxu0 0.0
    %327 = vmatpush2.msra.mxu0 %v196
    %328 = vmatprep.subr.mxu0 0.0
    %329 = vmatpush2.msra.mxu0 %v195
    %330 = vmatprep.subr.mxu0 0.0
    %331 = vmatpush2.msra.mxu0 %v194
    %332 = vmatprep.subr.mxu0 0.0
    %333 = vmatpush2.msra.mxu0 %v193
    %334 = vmatprep.subr.mxu0 0.0
    %335 = vmatpush2.msra.mxu0 %v192
    %336 = vmatprep.subr.mxu0 0.0
    %337 = vmatpush2.msra.mxu0 %v191
    %338 = vmatprep.subr.mxu0 0.0
    %339 = vmatpush2.msra.mxu0 %v190
    %340 = vmatprep.subr.mxu0 0.0
    %341 = vmatpush2.msra.mxu0 %v189
    %342 = vmatprep.subr.mxu0 0.0
    %343 = vmatpush2.msra.mxu0 %v188
    %344 = vmatprep.mubr.f32.mxu0 %v208
    %345 = vmatmul.mubr.f32.gmra.mxu0 %v108
    %v346 = vpop.f32.mrf.mxu0
    %v347 = vadd.f32 %v277, %v346
    %v348 = vpop.f32.mrf.mxu0
    %349 = vdwg.mxu0
    %v350 = vmax.f32 %v347, 0.0
    %vm351 = vcmp.gt.f32.partialorder %v37, 20.0
    %v352 = vmin.f32 %v37, 20.0
    %v353 = vmul.f32 %v352, 1.442695
    %v354 = vpow.pop %v353
    %v355 = vadd.f32 %v354, 1.0
    %v356 = vlog2.pop %v355
    %v357 = vmul.f32 %v356, 0.6931472
    %v358 = vmul.f32 -0.5, %v354
    %v359 = vadd.f32 %v358, 1.0
    %v360 = vmul.f32 %v359, %v354
    %v361 = vand.u32 2147483647, %v354
    %vm362 = vcmp.lt.f32.partialorder %v361, 0.0004427343
    %v363 = vsel %vm362, %v360, %v357
    %v364 = vsel %vm351, %v37, %v363
    %vm365 = vcmask 523264
    %v366 = vsel %vm365, %v364, 0.0
    %v367 = vadd.f32 %v350, %v366
    %368 = vst [vmem:[#allocation6] sm:$0x3] %v367
    %v369 = vld [vmem:[%s6] sm:$0xff]
    %v370 = vld [vmem:[%s6 + $0x8] sm:$0xff]
    %v371 = vld [vmem:[%s6 + $0x10] sm:$0xff]
    %v372 = vld [vmem:[%s6 + $0x18] sm:$0xff]
    %v373 = vld [vmem:[%s6 + $0x20] sm:$0xff]
    %v374 = vld [vmem:[%s6 + $0x28] sm:$0xff]
    %v375 = vld [vmem:[%s6 + $0x30] sm:$0xff]
    %v376 = vld [vmem:[%s6 + $0x38] sm:$0xff]
    %v377 = vld [vmem:[%s6 + $0x40] sm:$0xff]
    %v378 = vld [vmem:[%s6 + $0x48] sm:$0xff]
    %v379 = vld [vmem:[%s6 + $0x50] sm:$0xff]
    %v380 = vld [vmem:[%s6 + $0x58] sm:$0xff]
    %v381 = vld [vmem:[%s6 + $0x60] sm:$0xff]
    %v382 = vld [vmem:[%s6 + $0x68] sm:$0xff]
    %v383 = vld [vmem:[%s6 + $0x70] sm:$0xff]
    %v384 = vld [vmem:[%s6 + $0x78] sm:$0xff]
    %v385 = vld [vmem:[%s7] sm:$0x1]
    %v387 = vlaneseq
    %v388 = vshrl.u32 %v387, 7
    %v389 = vsub.s32 0, %v388
    %v390 = vrot.slane %v385, %v389
    %392 = vmatprep.subr.mxu0 0.0
    %393 = vmatpush1.msra.mxu0 %v384
    %394 = vmatprep.subr.mxu0 0.0
    %395 = vmatpush1.msra.mxu0 %v383
    %396 = vmatprep.subr.mxu0 0.0
    %397 = vmatpush1.msra.mxu0 %v382
    %398 = vmatprep.subr.mxu0 0.0
    %399 = vmatpush1.msra.mxu0 %v381
    %400 = vmatprep.subr.mxu0 0.0
    %401 = vmatpush1.msra.mxu0 %v380
    %402 = vmatprep.subr.mxu0 0.0
    %403 = vmatpush1.msra.mxu0 %v379
    %404 = vmatprep.subr.mxu0 0.0
    %405 = vmatpush1.msra.mxu0 %v378
    %406 = vmatprep.subr.mxu0 0.0
    %407 = vmatpush1.msra.mxu0 %v377
    %408 = vmatprep.subr.mxu0 0.0
    %409 = vmatpush1.msra.mxu0 %v376
    %410 = vmatprep.subr.mxu0 0.0
    %411 = vmatpush1.msra.mxu0 %v375
    %412 = vmatprep.subr.mxu0 0.0
    %413 = vmatpush1.msra.mxu0 %v374
    %414 = vmatprep.subr.mxu0 0.0
    %415 = vmatpush1.msra.mxu0 %v373
    %416 = vmatprep.subr.mxu0 0.0
    %417 = vmatpush1.msra.mxu0 %v372
    %418 = vmatprep.subr.mxu0 0.0
    %419 = vmatpush1.msra.mxu0 %v371
    %420 = vmatprep.subr.mxu0 0.0
    %421 = vmatpush1.msra.mxu0 %v370
    %422 = vmatprep.subr.mxu0 0.0
    %423 = vmatpush1.msra.mxu0 %v369
    %424 = vmatprep.subr.mxu0 0.0
    %425 = vmatpush2.msra.mxu0 0.0
    %426 = vmatprep.subr.mxu0 0.0
    %427 = vmatpush2.msra.mxu0 0.0
    %428 = vmatprep.subr.mxu0 0.0
    %429 = vmatpush2.msra.mxu0 0.0
    %430 = vmatprep.subr.mxu0 0.0
    %431 = vmatpush2.msra.mxu0 0.0
    %432 = vmatprep.subr.mxu0 0.0
    %433 = vmatpush2.msra.mxu0 0.0
    %434 = vmatprep.subr.mxu0 0.0
    %435 = vmatpush2.msra.mxu0 0.0
    %436 = vmatprep.subr.mxu0 0.0
    %437 = vmatpush2.msra.mxu0 0.0
    %438 = vmatprep.subr.mxu0 0.0
    %439 = vmatpush2.msra.mxu0 0.0
    %440 = vmatprep.subr.mxu0 0.0
    %441 = vmatpush2.msra.mxu0 0.0
    %442 = vmatprep.subr.mxu0 0.0
    %443 = vmatpush2.msra.mxu0 0.0
    %444 = vmatprep.subr.mxu0 0.0
    %445 = vmatpush2.msra.mxu0 0.0
    %446 = vmatprep.subr.mxu0 0.0
    %447 = vmatpush2.msra.mxu0 0.0
    %448 = vmatprep.subr.mxu0 0.0
    %449 = vmatpush2.msra.mxu0 0.0
    %450 = vmatprep.subr.mxu0 0.0
    %451 = vmatpush2.msra.mxu0 0.0
    %452 = vmatprep.subr.mxu0 0.0
    %453 = vmatpush2.msra.mxu0 0.0
    %454 = vmatprep.subr.mxu0 0.0
    %455 = vmatpush2.msra.mxu0 0.0
    %456 = vmatprep.mubr.f32.mxu0 0.0
    %457 = vmatmul.mubr.f32.gmra.mxu0 %v367
    %v458 = vpop.f32.mrf.mxu0
    %v459 = vadd.f32 %v390, %v458
    %v460 = vpop.f32.mrf.mxu0
    %461 = vdwg.mxu0
    %462 = vst [vmem:[#allocation2] sm:$0x3] %v459
    // Predicated region
    $region34: #{soundlenet5_forward_mode_one.1} parent=1 // pred_check
      _
    $region35: #{soundlenet5_forward_mode_one.1} parent=1 // pred_check_branch
      %464 = sbr.rel (0) target = $region37
    $region36: #{soundlenet5_forward_mode_one.1} parent=1 // pred_region
      %s466 = ssub.s32 32, 32
      %467 = vsyncadd [#allocation3], %s466
      %s469 = sshll.u32 [#allocation2], 4
      %s470 = int_to_ptr.vmem [resolvable:$true] %s469
      %472 = dma.vmem_to_hbm [thread:$0]  %s470, 32, %s8, [#allocation3]
    $region37: #{soundlenet5_forward_mode_one.1} parent=1 // pred_fallthru
      _
    // Predicated region
    $region38: #{soundlenet5_forward_mode_one.1} parent=1 // pred_check
      _
    $region39: #{soundlenet5_forward_mode_one.1} parent=1 // pred_check_branch
      %474 = sbr.rel (0) target = $region41
    $region40: #{soundlenet5_forward_mode_one.1} parent=1 // pred_region
      %s476 = ssub.s32 128, 128
      %477 = vsyncadd [#allocation5], %s476
      %s479 = sshll.u32 [#allocation4], 4
      %s480 = int_to_ptr.vmem [resolvable:$true] %s479
      %482 = dma.vmem_to_hbm [thread:$0]  %s480, 128, %s9, [#allocation5]
    $region41: #{soundlenet5_forward_mode_one.1} parent=1 // pred_fallthru
      _
    // Predicated region
    $region42: #{soundlenet5_forward_mode_one.1} parent=1 // pred_check
      _
    $region43: #{soundlenet5_forward_mode_one.1} parent=1 // pred_check_branch
      %484 = sbr.rel (0) target = $region45
    $region44: #{soundlenet5_forward_mode_one.1} parent=1 // pred_region
      %s486 = ssub.s32 32, 32
      %487 = vsyncadd [#allocation5], %s486
      %s489 = sshll.u32 [#allocation6], 4
      %s490 = int_to_ptr.vmem [resolvable:$true] %s489
      %492 = dma.vmem_to_hbm [thread:$0]  %s490, 32, %s10, [#allocation5]
    $region45: #{soundlenet5_forward_mode_one.1} parent=1 // pred_fallthru
      _
    // Predicated region
    $region46: #{soundlenet5_forward_mode_one.1} parent=1 // pred_check
      _
    $region47: #{soundlenet5_forward_mode_one.1} parent=1 // pred_check_branch
      %494 = sbr.rel (0) target = $region49
    $region48: #{soundlenet5_forward_mode_one.1} parent=1 // pred_region
      %495 = dma.done [#allocation3], 32
    $region49: #{soundlenet5_forward_mode_one.1} parent=1 // pred_fallthru
      _
    // Predicated region
    $region50: #{soundlenet5_forward_mode_one.1} parent=1 // pred_check
      _
    $region51: #{soundlenet5_forward_mode_one.1} parent=1 // pred_check_branch
      %497 = sbr.rel (0) target = $region53
    $region52: #{soundlenet5_forward_mode_one.1} parent=1 // pred_region
      %498 = dma.done [#allocation5], 128
    $region53: #{soundlenet5_forward_mode_one.1} parent=1 // pred_fallthru
      _
    // Predicated region
    $region54: #{soundlenet5_forward_mode_one.1} parent=1 // pred_check
      _
    $region55: #{soundlenet5_forward_mode_one.1} parent=1 // pred_check_branch
      %500 = sbr.rel (0) target = $region57
    $region56: #{soundlenet5_forward_mode_one.1} parent=1 // pred_region
      %501 = dma.done [#allocation5], 32
    $region57: #{soundlenet5_forward_mode_one.1} parent=1 // pred_fallthru
      _
    %502 = vsyncpa [#allocation3], 1
    %503 = vsyncpa [#allocation5], 1

</llo_original>
